<compile_context>
chip_gen: v7x
topology: tpu7x:2x2x1
jax: 0.10.0
libtpu: 0.0.40
codegen_flags: <defaults>
</compile_context>

<pallas_src>
import jax
import jax.numpy as jnp
from jax.experimental import pallas as pl
from jax.experimental.pallas import tpu as pltpu


def _round_up(x, m):
    return (x + m - 1) // m * m


def _tpu_generation_and_cores():
    """Best-effort (generation, has_two_tensorcores) from the device kind.

    Wrapper-side heuristic only (never affects lowering); unknown devices fall
    back to (None, False), i.e. conservative single-TensorCore tiling.
    """
    try:
        kind = jax.devices()[0].device_kind.lower()
    except Exception:
        return None, False
    gen = None
    for g in (7, 6, 5, 4, 3):
        if f"v{g}" in kind or f"tpu{g}" in kind:
            gen = g
            break
    if gen in (7, 4):
        two = True          # v7x / v4 megacore: two TensorCores share the grid
    elif gen == 5 and "lite" not in kind and "5e" not in kind:
        two = True          # v5p megacore
    else:
        two = False         # v5e, v6e: single TensorCore
    return gen, two


def _choose_m_tiling(M, cap, two_cores):
    """Pick (tm, m_pad) with m_pad % tm == 0 and tm <= max(cap, 16).

    Prefers exact divisors of M (no padded rows, no output slice).  On
    two-TensorCore chips additionally prefers an even (or at least >1) tile
    count so both cores get work; padding is only a fallback.
    """
    cap = max(16, cap)
    for align in (16, 8):
        if M % align:
            continue
        divs = [d for d in range(align, min(cap, M) + 1, align) if M % d == 0]
        if not divs:
            continue
        if not two_cores:
            return max(divs), M
        even = [d for d in divs if (M // d) % 2 == 0]
        if even:
            return max(even), M
        multi = [d for d in divs if (M // d) >= 2]
        if multi:
            return max(multi), M
        break  # only the grid-1 divisor exists: pad-split below instead
    if M <= cap:
        if two_cores and M > 16:
            tm = _round_up((M + 1) // 2, 16)
            return tm, 2 * tm
        tm = _round_up(M, 16)
        return tm, tm
    tm = cap
    step = 2 * tm if two_cores else tm
    return tm, _round_up(M, step)


def _patch_embed_kernel(x_ref, w_ref, b_ref, o_ref):
    # x_ref: (tm, Kp), w_ref: (Kp, Np), b_ref: (1, Np) f32, o_ref: (tm, Np).
    acc = jnp.dot(x_ref[...], w_ref[...], preferred_element_type=jnp.float32)
    o_ref[...] = (acc + b_ref[...]).astype(o_ref.dtype)


def vit_patch_embeddings(pixel_values, weight, bias, patch_size,
                         *, compute_dtype=jnp.bfloat16, out_dtype=None):
    """pixel_values: (B, C, H, W); weight: (hidden, C, ph, pw); bias: (hidden,).

    Returns (B, num_patches, hidden), matching ViTPatchEmbeddings.forward
    (projection(x).flatten(2).transpose(1, 2)).  out_dtype defaults to
    compute_dtype (bf16 perf path); pass float32 for strict Conv2d parity.
    """
    B, C, H, W = pixel_values.shape
    ph, pw = patch_size
    hidden = weight.shape[0]
    if weight.shape[1] != C:
        raise ValueError(
            "Make sure that the channel dimension of the pixel values match "
            "with the one set in the configuration.")
    if out_dtype is None:
        out_dtype = compute_dtype
    gh, gw = H // ph, W // pw
    num_patches = gh * gw

    # ---- patchify (layout only; the dtype cast fuses into this transpose) ----
    # (B, C, gh, ph, gw, pw) -> (B, gh, gw, C, ph, pw) -> (M, K)
    # TODO(synk): fold this reshuffle into the kernel itself (see file header).
    x = pixel_values.astype(compute_dtype).reshape(B, C, gh, ph, gw, pw)
    x = jnp.transpose(x, (0, 2, 4, 1, 3, 5))
    patches = x.reshape(B * num_patches, C * ph * pw)

    # Conv2d weight (hidden, C, ph, pw) -> (K, hidden) matmul weight.
    w2d = weight.reshape(hidden, C * ph * pw).T.astype(compute_dtype)
    # Bias stays f32: it is added to the f32 accumulator inside the kernel.
    b2d = bias.reshape(1, hidden).astype(jnp.float32)

    M, K = patches.shape
    N = hidden
    gen, two_cores = _tpu_generation_and_cores()
    in_bytes = jnp.dtype(compute_dtype).itemsize
    out_bytes = jnp.dtype(out_dtype).itemsize

    # Lane-dense output: pad hidden to a multiple of 128 (real ViT 768/1024
    # already is; only triggers for toy configs).
    Np = _round_up(N, 128)
    if Np != N:
        w2d = jnp.pad(w2d, ((0, 0), (0, Np - N)))
        b2d = jnp.pad(b2d, ((0, 0), (0, Np - N)))

    # Contraction dim: pad to a multiple of 128 when unaligned (e.g. /14 patch
    # sizes) for full-width loads and clean MXU tiling.  No-op for K = 768.
    Kp = _round_up(K, 128)
    if Kp != K:
        patches = jnp.pad(patches, ((0, 0), (0, Kp - K)))
        w2d = jnp.pad(w2d, ((0, Kp - K), (0, 0)))

    # M tile: per-generation cap, exact divisors preferred (no pad / slice),
    # even / multi tile counts only where two TensorCores share the grid.
    cap = 1024 if (gen is not None and gen >= 6
                   and in_bytes <= 2 and out_bytes <= 2) else 512
    tm, m_pad = _choose_m_tiling(M, cap, two_cores)
    if m_pad != M:
        patches = jnp.pad(patches, ((0, m_pad - M), (0, 0)))

    grid = (m_pad // tm,)

    # Scoped-VMEM budget from the actual (double-buffered) tile footprint;
    # stays well under v7x's 64 MiB physical VMEM.
    est_vmem = (2 * tm * Kp * in_bytes        # patch tiles (double-buffered)
                + 2 * Kp * Np * in_bytes      # resident weight (+ buffer)
                + 2 * Np * 4                  # bias
                + 2 * tm * Np * out_bytes)    # output tiles
    vmem_limit = int(min(56 * 2**20, max(24 * 2**20, 2 * est_vmem)))

    cost = pl.CostEstimate(
        flops=2 * m_pad * Kp * Np,
        transcendentals=0,
        bytes_accessed=(m_pad * Kp * in_bytes + Kp * Np * in_bytes
                        + Np * 4 + m_pad * Np * out_bytes),
    )

    out = pl.pallas_call(
        _patch_embed_kernel,
        out_shape=jax.ShapeDtypeStruct((m_pad, Np), out_dtype),
        grid=grid,
        in_specs=[
            pl.BlockSpec((tm, Kp), lambda i: (i, 0)),   # patch rows (tiled on M)
            pl.BlockSpec((Kp, Np), lambda i: (0, 0)),   # weight, grid-resident
            pl.BlockSpec((1, Np), lambda i: (0, 0)),    # bias, grid-resident
        ],
        out_specs=pl.BlockSpec((tm, Np), lambda i: (i, 0)),
        compiler_params=pltpu.CompilerParams(
            dimension_semantics=("parallel",),
            vmem_limit_bytes=vmem_limit,
        ),
        cost_estimate=cost,
    )(patches, w2d, b2d)

    if m_pad != M or Np != N:
        out = out[:M, :N]
    return out.reshape(B, num_patches, N)


def _reference(pixel_values, weight, bias, patch_size):
    """Pure-JAX f32 reference (equivalent to the stride==kernel Conv2d)."""
    B, C, H, W = pixel_values.shape
    ph, pw = patch_size
    hidden = weight.shape[0]
    gh, gw = H // ph, W // pw
    x = pixel_values.reshape(B, C, gh, ph, gw, pw)
    x = jnp.transpose(x, (0, 2, 4, 1, 3, 5)).reshape(B * gh * gw, C * ph * pw)
    w2d = weight.reshape(hidden, C * ph * pw).T
    return (x.astype(jnp.float32) @ w2d.astype(jnp.float32)
            + bias.astype(jnp.float32)).reshape(B, gh * gw, hidden)


if __name__ == "__main__":
    # config: image_size=16, patch_size=4, num_channels=4, hidden_size=32
    B, C, H, W = 2, 4, 16, 16
    ph, pw = 4, 4
    hidden = 32

    key = jax.random.PRNGKey(0)
    k_x, k_w, k_b = jax.random.split(key, 3)
    pixel_values = jax.random.normal(k_x, (B, C, H, W), dtype=jnp.float32)
    weight = jax.random.normal(k_w, (hidden, C, ph, pw), dtype=jnp.float32) * 0.02
    bias = jax.random.normal(k_b, (hidden,), dtype=jnp.float32) * 0.02

    num_patches = (H // ph) * (W // pw)
    ref = _reference(pixel_values, weight, bias, (ph, pw))

    # f32 in/out path: strict parity with the reference / PyTorch Conv2d.
    out_f32 = vit_patch_embeddings(pixel_values, weight, bias, (ph, pw),
                                   compute_dtype=jnp.float32)
    out_f32 = jax.block_until_ready(out_f32)
    assert out_f32.shape == (B, num_patches, hidden)
    assert out_f32.dtype == jnp.float32
    assert jnp.allclose(out_f32, ref, atol=1e-5, rtol=1e-5)

    # Perf-default path: bf16 in, f32 accumulate, bf16 out.
    out_bf16 = vit_patch_embeddings(pixel_values, weight, bias, (ph, pw))
    out_bf16 = jax.block_until_ready(out_bf16)
    assert out_bf16.shape == (B, num_patches, hidden)
    assert out_bf16.dtype == jnp.bfloat16
    assert jnp.allclose(out_bf16.astype(jnp.float32), ref, atol=3e-2, rtol=3e-2)

    print("KERNEL_OK")
</pallas_src>

<mosaic_0001>
module attributes {stable_mosaic.version = 11 : i64} {
  func.func @_patch_embed_kernel(%arg0: i32, %arg1: memref<32x128xf32, #tpu.memory_space<vmem>>, %arg2: memref<128x128xf32, #tpu.memory_space<vmem>>, %arg3: memref<1x128xf32, #tpu.memory_space<vmem>>, %arg4: memref<32x128xf32, #tpu.memory_space<vmem>>) attributes {dimension_semantics = [#tpu.dimension_semantics<parallel>], iteration_bounds = array<i64: 1>, scalar_prefetch = 0 : i64, scratch_operands = 0 : i64, tpu.core_type = #tpu.core_type<tc>, window_params = [{transform_indices = @transform_0, window_bounds = array<i64: 32, 128>}, {pipeline_mode = #tpu.pipeline_mode<synchronous>, transform_indices = @transform_1, window_bounds = array<i64: 128, 128>}, {pipeline_mode = #tpu.pipeline_mode<synchronous>, transform_indices = @transform_2, window_bounds = array<i64: 1, 128>}, {transform_indices = @transform_3, window_bounds = array<i64: 32, 128>}]} {
    %c0 = arith.constant 0 : index
    %c0_0 = arith.constant 0 : index
    %0 = vector.load %arg1[%c0, %c0_0] : memref<32x128xf32, #tpu.memory_space<vmem>>, vector<32x128xf32>
    %c0_1 = arith.constant 0 : index
    %c0_2 = arith.constant 0 : index
    %1 = vector.load %arg2[%c0_1, %c0_2] : memref<128x128xf32, #tpu.memory_space<vmem>>, vector<128x128xf32>
    %cst = arith.constant dense<0.000000e+00> : vector<32x128xf32>
    %2 = tpu.matmul %0, %1, %cst {dimension_numbers = #tpu.dot_dimension_numbers<[1], [0], [0], [1], [0, 0, 1, 1], [], []>} : vector<32x128xf32>, vector<128x128xf32>, vector<32x128xf32> -> vector<32x128xf32>
    %c0_3 = arith.constant 0 : index
    %c0_4 = arith.constant 0 : index
    %3 = vector.load %arg3[%c0_3, %c0_4] : memref<1x128xf32, #tpu.memory_space<vmem>>, vector<1x128xf32>
    %4 = vector.broadcast %3 : vector<1x128xf32> to vector<32x128xf32>
    %5 = arith.addf %2, %4 : vector<32x128xf32>
    %c0_5 = arith.constant 0 : index
    %c0_6 = arith.constant 0 : index
    %6 = vector.load %arg4[%c0_5, %c0_6] : memref<32x128xf32, #tpu.memory_space<vmem>>, vector<32x128xf32>
    tpu.vector_store %arg4[%c0_5, %c0_6], %5 {strides = array<i32>} : memref<32x128xf32, #tpu.memory_space<vmem>>, vector<32x128xf32>,
    return
  }
  func.func @transform_0(%arg0: i32) -> (i32, i32) {
    %c0_i32 = arith.constant 0 : i32
    %c0_i32_0 = arith.constant 0 : i32
    return %arg0, %c0_i32 : i32, i32
  }
  func.func @transform_1(%arg0: i32) -> (i32, i32) {
    %c0_i32 = arith.constant 0 : i32
    %c0_i32_0 = arith.constant 0 : i32
    %c0_i32_1 = arith.constant 0 : i32
    return %c0_i32, %c0_i32_0 : i32, i32
  }
  func.func @transform_2(%arg0: i32) -> (i32, i32) {
    %c0_i32 = arith.constant 0 : i32
    %c0_i32_0 = arith.constant 0 : i32
    %c0_i32_1 = arith.constant 0 : i32
    return %c0_i32, %c0_i32_0 : i32, i32
  }
  func.func @transform_3(%arg0: i32) -> (i32, i32) {
    %c0_i32 = arith.constant 0 : i32
    %c0_i32_0 = arith.constant 0 : i32
    return %arg0, %c0_i32 : i32, i32
  }
}

</mosaic_0001>

<llo_original>
// kernel: tpu_custom_call.1
$region0: #{tpu_custom_call.1}
  #allocation0 [shape = 'u32[]', space=smem, size = 0x4, offset = 0x4, fixed_abs, tag = 'smem constant byte address 0x4 - core index']
  #allocation1 [shape = 'u32[144,128]{1,0:T(1,128)}', space=vmem, size = 0x12000, scoped, tag = 'internal scratch']
  %s0 = inlined_call_operand.hbm [shape: f32[32,128], index: 0, kind: input, shape index: {}]
  %s1 = inlined_call_operand.hbm [shape: f32[128,128], index: 1, kind: input, shape index: {}]
  %s2 = inlined_call_operand.vmem [shape: f32[1,128], index: 2, kind: input, shape index: {}]
  %s3 = inlined_call_operand.hbm [shape: f32[32,128], index: 3, kind: output, shape index: {}]
  %s4 = sld [smem:[#allocation0]]
  $region30: #{tpu_custom_call.1} parent=0
    _
  %s6 = ssub.s32 1, %s4
  %s7 = scalar_select 0, %s6, %s4
  $region1: #{tpu_custom_call.1} parent=0
    #allocation2 [shape = 'u8[16384]{0}', space=vmem, size = 0x4000, scoped, tag = 'input window, operand 0, single buffered']
    #allocation3 [shape = 's32[1]{0}', space=sflag, size = 0x4, scoped, tag = 'scoped memory for tpu_custom_call.1']
    #allocation4 [shape = 's32[1]{0}', space=sflag, size = 0x4, scoped, tag = 'scoped memory for tpu_custom_call.1']
    #allocation5 [shape = 'u8[65536]{0}', space=vmem, size = 0x10000, scoped, tag = 'input window, operand 1, single buffered']
    #allocation6 [shape = 's32[1]{0}', space=sflag, size = 0x4, scoped, tag = 'scoped memory for tpu_custom_call.1']
    #allocation7 [shape = 'u8[16384]{0}', space=vmem, size = 0x4000, scoped, tag = 'output window, operand 0, single buffered']
    %8 = vsyncpa [#allocation3], 0
    %9 = vsyncpa [#allocation6], 0
    %10 = vsyncpa [#allocation4], 0
    // Predicated region
    $region2: #{tpu_custom_call.1} parent=1 // pred_check
      _
    $region3: #{tpu_custom_call.1} parent=1 // pred_check_branch
      %12 = sbr.rel (0) target = $region5
    $region4: #{tpu_custom_call.1} parent=1 // pred_region
      %s14 = ssub.s32 512, 512
      %15 = vsyncadd [#allocation3], %s14
      %s16 = sshll.u32 [#allocation2], 4
      %s17 = int_to_ptr.vmem [resolvable:$true] %s16
      %22 = dma.hbm_to_vmem [thread:$0]  %s0, 512, %s17, [#allocation3], 128, 128, 8
    $region5: #{tpu_custom_call.1} parent=1 // pred_fallthru
      _
    // Predicated region
    $region6: #{tpu_custom_call.1} parent=1 // pred_check
      _
    $region7: #{tpu_custom_call.1} parent=1 // pred_check_branch
      %24 = sbr.rel (0) target = $region9
    $region8: #{tpu_custom_call.1} parent=1 // pred_region
      %s26 = ssub.s32 2048, 2048
      %27 = vsyncadd [#allocation6], %s26
      %s28 = sshll.u32 [#allocation5], 4
      %s29 = int_to_ptr.vmem [resolvable:$true] %s28
      %34 = dma.hbm_to_vmem [thread:$0]  %s1, 2048, %s29, [#allocation6], 128, 128, 8
    $region9: #{tpu_custom_call.1} parent=1 // pred_fallthru
      _
    // Predicated region
    $region10: #{tpu_custom_call.1} parent=1 // pred_check
      _
    $region11: #{tpu_custom_call.1} parent=1 // pred_check_branch
      %36 = sbr.rel (0) target = $region13
    $region12: #{tpu_custom_call.1} parent=1 // pred_region
      _
    $region13: #{tpu_custom_call.1} parent=1 // pred_fallthru
      _
    // Predicated region
    $region14: #{tpu_custom_call.1} parent=1 // pred_check
      _
    $region15: #{tpu_custom_call.1} parent=1 // pred_check_branch
      %38 = sbr.rel (0) target = $region17
    $region16: #{tpu_custom_call.1} parent=1 // pred_region
      %39 = dma.done [#allocation3], 512
    $region17: #{tpu_custom_call.1} parent=1 // pred_fallthru
      _
    // Predicated region
    $region18: #{tpu_custom_call.1} parent=1 // pred_check
      _
    $region19: #{tpu_custom_call.1} parent=1 // pred_check_branch
      %41 = sbr.rel (0) target = $region21
    $region20: #{tpu_custom_call.1} parent=1 // pred_region
      %42 = dma.done [#allocation6], 2048
    $region21: #{tpu_custom_call.1} parent=1 // pred_fallthru
      _
    %v43 = vld [vmem:[#allocation2] sm:$0xff]
    %v44 = vld [vmem:[#allocation2 + $0x8] sm:$0xff]
    %v45 = vld [vmem:[#allocation2 + $0x10] sm:$0xff]
    %v46 = vld [vmem:[#allocation2 + $0x18] sm:$0xff]
    %v47 = vld [vmem:[#allocation5] sm:$0xff]
    %v48 = vld [vmem:[#allocation5 + $0x8] sm:$0xff]
    %v49 = vld [vmem:[#allocation5 + $0x10] sm:$0xff]
    %v50 = vld [vmem:[#allocation5 + $0x18] sm:$0xff]
    %v51 = vld [vmem:[#allocation5 + $0x20] sm:$0xff]
    %v52 = vld [vmem:[#allocation5 + $0x28] sm:$0xff]
    %v53 = vld [vmem:[#allocation5 + $0x30] sm:$0xff]
    %v54 = vld [vmem:[#allocation5 + $0x38] sm:$0xff]
    %v55 = vld [vmem:[#allocation5 + $0x40] sm:$0xff]
    %v56 = vld [vmem:[#allocation5 + $0x48] sm:$0xff]
    %v57 = vld [vmem:[#allocation5 + $0x50] sm:$0xff]
    %v58 = vld [vmem:[#allocation5 + $0x58] sm:$0xff]
    %v59 = vld [vmem:[#allocation5 + $0x60] sm:$0xff]
    %v60 = vld [vmem:[#allocation5 + $0x68] sm:$0xff]
    %v61 = vld [vmem:[#allocation5 + $0x70] sm:$0xff]
    %v62 = vld [vmem:[#allocation5 + $0x78] sm:$0xff]
    %v63 = vld [vmem:[%s2] sm:$0x1]
    %v65 = vlaneseq
    %v66 = vshrl.u32 %v65, 7
    %v67 = vsub.s32 0, %v66
    %v68 = vrot.slane %v63, %v67
    %70 = vmatprep.subr.mxu0 0.0
    %71 = vmatpush1.msra.mxu0 %v47
    %72 = vmatprep.subr.mxu0 0.0
    %73 = vmatpush1.msra.mxu0 %v48
    %74 = vmatprep.subr.mxu0 0.0
    %75 = vmatpush1.msra.mxu0 %v49
    %76 = vmatprep.subr.mxu0 0.0
    %77 = vmatpush1.msra.mxu0 %v50
    %78 = vmatprep.subr.mxu0 0.0
    %79 = vmatpush1.msra.mxu0 %v51
    %80 = vmatprep.subr.mxu0 0.0
    %81 = vmatpush1.msra.mxu0 %v52
    %82 = vmatprep.subr.mxu0 0.0
    %83 = vmatpush1.msra.mxu0 %v53
    %84 = vmatprep.subr.mxu0 0.0
    %85 = vmatpush1.msra.mxu0 %v54
    %86 = vmatprep.subr.mxu0 0.0
    %87 = vmatpush1.msra.mxu0 %v55
    %88 = vmatprep.subr.mxu0 0.0
    %89 = vmatpush1.msra.mxu0 %v56
    %90 = vmatprep.subr.mxu0 0.0
    %91 = vmatpush1.msra.mxu0 %v57
    %92 = vmatprep.subr.mxu0 0.0
    %93 = vmatpush1.msra.mxu0 %v58
    %94 = vmatprep.subr.mxu0 0.0
    %95 = vmatpush1.msra.mxu0 %v59
    %96 = vmatprep.subr.mxu0 0.0
    %97 = vmatpush1.msra.mxu0 %v60
    %98 = vmatprep.subr.mxu0 0.0
    %99 = vmatpush1.msra.mxu0 %v61
    %100 = vmatprep.subr.mxu0 0.0
    %101 = vmatpush1.msra.mxu0 %v62
    %102 = vmatprep.subr.mxu0 0.0
    %103 = vmatpush1.msra.mxu0 0.0
    %104 = vmatprep.subr.mxu0 0.0
    %105 = vmatpush1.msra.mxu0 0.0
    %106 = vmatprep.subr.mxu0 0.0
    %107 = vmatpush1.msra.mxu0 0.0
    %108 = vmatprep.subr.mxu0 0.0
    %109 = vmatpush1.msra.mxu0 0.0
    %110 = vmatprep.subr.mxu0 0.0
    %111 = vmatpush1.msra.mxu0 0.0
    %112 = vmatprep.subr.mxu0 0.0
    %113 = vmatpush1.msra.mxu0 0.0
    %114 = vmatprep.subr.mxu0 0.0
    %115 = vmatpush1.msra.mxu0 0.0
    %116 = vmatprep.subr.mxu0 0.0
    %117 = vmatpush1.msra.mxu0 0.0
    %118 = vmatprep.subr.mxu0 0.0
    %119 = vmatpush1.msra.mxu0 0.0
    %120 = vmatprep.subr.mxu0 0.0
    %121 = vmatpush1.msra.mxu0 0.0
    %122 = vmatprep.subr.mxu0 0.0
    %123 = vmatpush1.msra.mxu0 0.0
    %124 = vmatprep.subr.mxu0 0.0
    %125 = vmatpush1.msra.mxu0 0.0
    %126 = vmatprep.subr.mxu0 0.0
    %127 = vmatpush1.msra.mxu0 0.0
    %128 = vmatprep.subr.mxu0 0.0
    %129 = vmatpush1.msra.mxu0 0.0
    %130 = vmatprep.subr.mxu0 0.0
    %131 = vmatpush1.msra.mxu0 0.0
    %132 = vmatprep.subr.mxu0 0.0
    %133 = vmatpush1.msra.mxu0 0.0
    %134 = vmatprep.mubr.f32.mxu0 0.0
    %135 = vmatmul.mubr.f32.gmra.mrb[0].mxu0 %v43
    %v136 = vpop.f32.mrb[0].mxu0
    %v137 = vadd.f32 %v68, %v136
    %v138 = vpop.f32.mrb[0].mxu0
    %139 = vmatprep.mubr.f32.mxu0 0.0
    %140 = vmatmul.mubr.f32.gmra.mrb[0].mxu0 %v44
    %v141 = vpop.f32.mrb[0].mxu0
    %v142 = vadd.f32 %v68, %v141
    %v143 = vpop.f32.mrb[0].mxu0
    %144 = vmatprep.mubr.f32.mxu0 0.0
    %145 = vmatmul.mubr.f32.gmra.mrb[0].mxu0 %v45
    %v146 = vpop.f32.mrb[0].mxu0
    %v147 = vadd.f32 %v68, %v146
    %v148 = vpop.f32.mrb[0].mxu0
    %149 = vmatprep.mubr.f32.mxu0 0.0
    %150 = vmatmul.mubr.f32.gmra.mrb[0].mxu0 %v46
    %v151 = vpop.f32.mrb[0].mxu0
    %v152 = vadd.f32 %v68, %v151
    %v153 = vpop.f32.mrb[0].mxu0
    %154 = vdwg.mxu0
    %155 = vst [vmem:[#allocation7] sm:$0xff] %v137
    %156 = vst [vmem:[#allocation7 + $0x8] sm:$0xff] %v142
    %157 = vst [vmem:[#allocation7 + $0x10] sm:$0xff] %v147
    %158 = vst [vmem:[#allocation7 + $0x18] sm:$0xff] %v152
    // Predicated region
    $region22: #{tpu_custom_call.1} parent=1 // pred_check
      _
    $region23: #{tpu_custom_call.1} parent=1 // pred_check_branch
      %160 = sbr.rel (0) target = $region25
    $region24: #{tpu_custom_call.1} parent=1 // pred_region
      %s162 = ssub.s32 512, 512
      %163 = vsyncadd [#allocation4], %s162
      %s164 = sshll.u32 [#allocation7], 4
      %s165 = int_to_ptr.vmem [resolvable:$true] %s164
      %170 = dma.vmem_to_hbm [thread:$0]  %s165, 512, %s3, [#allocation4], 128, 128, 8
    $region25: #{tpu_custom_call.1} parent=1 // pred_fallthru
      _
    // Predicated region
    $region26: #{tpu_custom_call.1} parent=1 // pred_check
      _
    $region27: #{tpu_custom_call.1} parent=1 // pred_check_branch
      %172 = sbr.rel (0) target = $region29
    $region28: #{tpu_custom_call.1} parent=1 // pred_region
      %173 = dma.done [#allocation4], 512
    $region29: #{tpu_custom_call.1} parent=1 // pred_fallthru
      _
    %174 = vsyncpa [#allocation3], 1
    %175 = vsyncpa [#allocation6], 1
    %176 = vsyncpa [#allocation4], 1

</llo_original>
